<compile_context>
chip_gen: v7x
topology: tpu7x:2x2x1
jax: 0.10.0
libtpu: 0.0.40
codegen_flags: <defaults>
</compile_context>

<pallas_src>
import functools

import jax
import jax.numpy as jnp
from jax.experimental import pallas as pl
from jax.experimental.pallas import tpu as pltpu


def _round_up(x, m):
    return ((x + m - 1) // m) * m


def mlp_kernel(x_ref, w1_ref, b1_ref, w2_ref, b2_ref, o_ref, acc_ref):
    k = pl.program_id(1)

    @pl.when(k == 0)
    def _init():
        acc_ref[...] = jnp.zeros_like(acc_ref)

    # Hidden-layer slice: (TB, TH) = relu(x @ W1[:, h_tile] + b1[h_tile])
    h = jnp.dot(x_ref[...], w1_ref[...], preferred_element_type=jnp.float32)
    h = jnp.maximum(h + b1_ref[...], 0.0)          # (TB,TH) + (1,TH) broadcast

    # Accumulate this hidden tile's contribution to the output tile.
    acc_ref[...] += jnp.dot(h.astype(w2_ref.dtype), w2_ref[...],
                            preferred_element_type=jnp.float32)

    @pl.when(k == pl.num_programs(1) - 1)
    def _finalize():
        o_ref[...] = (acc_ref[...] + b2_ref[...]).astype(o_ref.dtype)


@functools.partial(jax.jit, static_argnames=("tb", "th"))
def mlp_forward(x, w1_t, b1, w2_t, b2, *, tb=None, th=None):
    """x: (B, D_in); w1_t: (D_in, H); b1: (H,); w2_t: (H, D_out); b2: (D_out,)."""
    B, D_in = x.shape
    H = w1_t.shape[1]
    D_out = w2_t.shape[1]

    # ---- tile sizes (sublane mult of 8, lane mult of 128; modest sizes so a
    #      v6e-tuned blocking also fits v7x's 64 MiB VMEM) ----
    if tb is None:
        tb = min(128, _round_up(B, 8))
    if th is None:
        th = min(512, _round_up(H, 128))

    B_pad = _round_up(B, tb)
    H_pad = _round_up(H, th)
    D_out_pad = _round_up(D_out, 128)

    # Zero padding keeps the math exact: padded hidden units are relu(0+0)=0
    # and their W2 rows are 0; padded batch rows / output lanes are sliced off.
    x_p = jnp.pad(x, ((0, B_pad - B), (0, 0)))
    w1_p = jnp.pad(w1_t, ((0, 0), (0, H_pad - H)))
    b1_p = jnp.pad(b1, (0, H_pad - H)).reshape(1, H_pad)
    w2_p = jnp.pad(w2_t, ((0, H_pad - H), (0, D_out_pad - D_out)))
    b2_p = jnp.pad(b2, (0, D_out_pad - D_out)).reshape(1, D_out_pad)

    nb = B_pad // tb
    nh = H_pad // th

    itemsize = x.dtype.itemsize
    cost = pl.CostEstimate(
        flops=2 * B_pad * (D_in * H_pad + H_pad * D_out_pad),
        transcendentals=0,
        bytes_accessed=(x_p.size + w1_p.size + w2_p.size
                        + B_pad * D_out_pad) * itemsize,
    )

    out = pl.pallas_call(
        mlp_kernel,
        out_shape=jax.ShapeDtypeStruct((B_pad, D_out_pad), x.dtype),
        grid_spec=pltpu.PrefetchScalarGridSpec(
            num_scalar_prefetch=0,
            grid=(nb, nh),                      # (batch tiles, hidden tiles)
            in_specs=[
                pl.BlockSpec((tb, D_in), lambda i, k: (i, 0)),        # x tile
                pl.BlockSpec((D_in, th), lambda i, k: (0, k)),        # W1 tile
                pl.BlockSpec((1, th), lambda i, k: (0, k)),           # b1 tile
                pl.BlockSpec((th, D_out_pad), lambda i, k: (k, 0)),   # W2 tile
                pl.BlockSpec((1, D_out_pad), lambda i, k: (0, 0)),    # b2 (resident)
            ],
            out_specs=pl.BlockSpec((tb, D_out_pad), lambda i, k: (i, 0)),
            scratch_shapes=[pltpu.VMEM((tb, D_out_pad), jnp.float32)],
        ),
        compiler_params=pltpu.CompilerParams(
            dimension_semantics=("parallel", "arbitrary")),
        cost_estimate=cost,
    )(x_p, w1_p, b1_p, w2_p, b2_p)

    return out[:B, :D_out]


def init_linear_params(key, fan_in, fan_out):
    """Deterministic init mimicking torch.nn.Linear (uniform +/- 1/sqrt(fan_in))."""
    k_w, k_b = jax.random.split(key)
    bound = 1.0 / jnp.sqrt(fan_in)
    # Stored directly in transposed (fan_in, fan_out) layout for the kernel.
    w_t = jax.random.uniform(k_w, (fan_in, fan_out), jnp.float32, -bound, bound)
    b = jax.random.uniform(k_b, (fan_out,), jnp.float32, -bound, bound)
    return w_t, b


def mlp_reference(x, w1_t, b1, w2_t, b2):
    h = jnp.maximum(x @ w1_t + b1, 0.0)
    return h @ w2_t + b2


if __name__ == "__main__":
    key = jax.random.PRNGKey(0)
    k_x, k_l1, k_l2, k_x2, k_l3, k_l4 = jax.random.split(key, 6)

    # ---- small MLP(D_in, H_1, D_out), matching the PyTorch module ----
    B, D_in, H_1, D_out = 8, 32, 64, 16
    x = jax.random.normal(k_x, (B, D_in), jnp.float32)
    w1_t, b1 = init_linear_params(k_l1, D_in, H_1)
    w2_t, b2 = init_linear_params(k_l2, H_1, D_out)

    y = mlp_forward(x, w1_t, b1, w2_t, b2)
    jax.block_until_ready(y)
    y_ref = mlp_reference(x, w1_t, b1, w2_t, b2)
    assert y.shape == (B, D_out)
    assert jnp.allclose(y, y_ref, atol=1e-4, rtol=1e-4)

    # ---- second config exercising multiple batch tiles, the hidden-dim
    #      reduction loop, and padding/slicing of every dimension ----
    B2, D_in2, H_2, D_out2 = 100, 64, 256, 48
    x2 = jax.random.normal(k_x2, (B2, D_in2), jnp.float32)
    w1_t2, b1_2 = init_linear_params(k_l3, D_in2, H_2)
    w2_t2, b2_2 = init_linear_params(k_l4, H_2, D_out2)

    y2 = mlp_forward(x2, w1_t2, b1_2, w2_t2, b2_2, tb=32, th=128)  # grid (4, 2)
    jax.block_until_ready(y2)
    y2_ref = mlp_reference(x2, w1_t2, b1_2, w2_t2, b2_2)
    assert y2.shape == (B2, D_out2)
    assert jnp.allclose(y2, y2_ref, atol=2e-2, rtol=2e-2)

    print("KERNEL_OK")
</pallas_src>

<mosaic_0001>
module attributes {stable_mosaic.version = 11 : i64} {
  func.func @mlp_kernel(%arg0: i32, %arg1: i32, %arg2: memref<8x32xf32, #tpu.memory_space<vmem>>, %arg3: memref<32x128xf32, #tpu.memory_space<vmem>>, %arg4: memref<1x128xf32, #tpu.memory_space<vmem>>, %arg5: memref<128x128xf32, #tpu.memory_space<vmem>>, %arg6: memref<1x128xf32, #tpu.memory_space<vmem>>, %arg7: memref<8x128xf32, #tpu.memory_space<vmem>>, %arg8: memref<8x128xf32, #tpu.memory_space<vmem>>) attributes {dimension_semantics = [#tpu.dimension_semantics<parallel>, #tpu.dimension_semantics<arbitrary>], iteration_bounds = array<i64: 1, 1>, scalar_prefetch = 0 : i64, scratch_operands = 1 : i64, tpu.core_type = #tpu.core_type<tc>, window_params = [{transform_indices = @transform_0, window_bounds = array<i64: 8, 32>}, {transform_indices = @transform_1, window_bounds = array<i64: 32, 128>}, {transform_indices = @transform_2, window_bounds = array<i64: 1, 128>}, {transform_indices = @transform_3, window_bounds = array<i64: 128, 128>}, {pipeline_mode = #tpu.pipeline_mode<synchronous>, transform_indices = @transform_4, window_bounds = array<i64: 1, 128>}, {transform_indices = @transform_5, window_bounds = array<i64: 8, 128>}]} {
    %c0_i32 = arith.constant 0 : i32
    %0 = arith.cmpi eq, %arg1, %c0_i32 : i32
    %1 = arith.extui %0 : i1 to i32
    %c0_i32_0 = arith.constant 0 : i32
    %2 = arith.cmpi ne, %1, %c0_i32_0 : i32
    scf.if %2 {
      %cst_16 = arith.constant 0.000000e+00 : f32
      %19 = vector.broadcast %cst_16 : f32 to vector<8x128xf32>
      %c0_17 = arith.constant 0 : index
      %c0_18 = arith.constant 0 : index
      %20 = vector.load %arg8[%c0_17, %c0_18] : memref<8x128xf32, #tpu.memory_space<vmem>>, vector<8x128xf32>
      tpu.vector_store %arg8[%c0_17, %c0_18], %19 {strides = array<i32>} : memref<8x128xf32, #tpu.memory_space<vmem>>, vector<8x128xf32>,
    } else {
    }
    %c0 = arith.constant 0 : index
    %c0_1 = arith.constant 0 : index
    %3 = vector.load %arg2[%c0, %c0_1] : memref<8x32xf32, #tpu.memory_space<vmem>>, vector<8x32xf32>
    %c0_2 = arith.constant 0 : index
    %c0_3 = arith.constant 0 : index
    %4 = vector.load %arg3[%c0_2, %c0_3] : memref<32x128xf32, #tpu.memory_space<vmem>>, vector<32x128xf32>
    %cst = arith.constant dense<0.000000e+00> : vector<8x128xf32>
    %5 = tpu.matmul %3, %4, %cst {dimension_numbers = #tpu.dot_dimension_numbers<[1], [0], [0], [1], [0, 0, 1, 1], [], []>} : vector<8x32xf32>, vector<32x128xf32>, vector<8x128xf32> -> vector<8x128xf32>
    %c0_4 = arith.constant 0 : index
    %c0_5 = arith.constant 0 : index
    %6 = vector.load %arg4[%c0_4, %c0_5] : memref<1x128xf32, #tpu.memory_space<vmem>>, vector<1x128xf32>
    %7 = vector.broadcast %6 : vector<1x128xf32> to vector<8x128xf32>
    %8 = arith.addf %5, %7 : vector<8x128xf32>
    %cst_6 = arith.constant 0.000000e+00 : f32
    %9 = vector.broadcast %cst_6 : f32 to vector<8x128xf32>
    %10 = arith.maximumf %8, %9 : vector<8x128xf32>
    %c0_7 = arith.constant 0 : index
    %c0_8 = arith.constant 0 : index
    %11 = vector.load %arg8[%c0_7, %c0_8] : memref<8x128xf32, #tpu.memory_space<vmem>>, vector<8x128xf32>
    %c0_9 = arith.constant 0 : index
    %c0_10 = arith.constant 0 : index
    %12 = vector.load %arg5[%c0_9, %c0_10] : memref<128x128xf32, #tpu.memory_space<vmem>>, vector<128x128xf32>
    %cst_11 = arith.constant dense<0.000000e+00> : vector<8x128xf32>
    %13 = tpu.matmul %10, %12, %cst_11 {dimension_numbers = #tpu.dot_dimension_numbers<[1], [0], [0], [1], [0, 0, 1, 1], [], []>} : vector<8x128xf32>, vector<128x128xf32>, vector<8x128xf32> -> vector<8x128xf32>
    %14 = arith.addf %11, %13 : vector<8x128xf32>
    %c0_12 = arith.constant 0 : index
    %c0_13 = arith.constant 0 : index
    %15 = vector.load %arg8[%c0_12, %c0_13] : memref<8x128xf32, #tpu.memory_space<vmem>>, vector<8x128xf32>
    tpu.vector_store %arg8[%c0_12, %c0_13], %14 {strides = array<i32>} : memref<8x128xf32, #tpu.memory_space<vmem>>, vector<8x128xf32>,
    %c0_i32_14 = arith.constant 0 : i32
    %16 = arith.cmpi eq, %arg1, %c0_i32_14 : i32
    %17 = arith.extui %16 : i1 to i32
    %c0_i32_15 = arith.constant 0 : i32
    %18 = arith.cmpi ne, %17, %c0_i32_15 : i32
    scf.if %18 {
      %c0_16 = arith.constant 0 : index
      %c0_17 = arith.constant 0 : index
      %19 = vector.load %arg8[%c0_16, %c0_17] : memref<8x128xf32, #tpu.memory_space<vmem>>, vector<8x128xf32>
      %c0_18 = arith.constant 0 : index
      %c0_19 = arith.constant 0 : index
      %20 = vector.load %arg6[%c0_18, %c0_19] : memref<1x128xf32, #tpu.memory_space<vmem>>, vector<1x128xf32>
      %21 = vector.broadcast %20 : vector<1x128xf32> to vector<8x128xf32>
      %22 = arith.addf %19, %21 : vector<8x128xf32>
      %c0_20 = arith.constant 0 : index
      %c0_21 = arith.constant 0 : index
      %23 = vector.load %arg7[%c0_20, %c0_21] : memref<8x128xf32, #tpu.memory_space<vmem>>, vector<8x128xf32>
      tpu.vector_store %arg7[%c0_20, %c0_21], %22 {strides = array<i32>} : memref<8x128xf32, #tpu.memory_space<vmem>>, vector<8x128xf32>,
    } else {
    }
    return
  }
  func.func @transform_0(%arg0: i32, %arg1: i32) -> (i32, i32) {
    %c0_i32 = arith.constant 0 : i32
    %c0_i32_0 = arith.constant 0 : i32
    return %arg0, %c0_i32 : i32, i32
  }
  func.func @transform_1(%arg0: i32, %arg1: i32) -> (i32, i32) {
    %c0_i32 = arith.constant 0 : i32
    %c0_i32_0 = arith.constant 0 : i32
    return %c0_i32, %arg1 : i32, i32
  }
  func.func @transform_2(%arg0: i32, %arg1: i32) -> (i32, i32) {
    %c0_i32 = arith.constant 0 : i32
    %c0_i32_0 = arith.constant 0 : i32
    return %c0_i32, %arg1 : i32, i32
  }
  func.func @transform_3(%arg0: i32, %arg1: i32) -> (i32, i32) {
    %c0_i32 = arith.constant 0 : i32
    %c0_i32_0 = arith.constant 0 : i32
    return %arg1, %c0_i32 : i32, i32
  }
  func.func @transform_4(%arg0: i32, %arg1: i32) -> (i32, i32) {
    %c0_i32 = arith.constant 0 : i32
    %c0_i32_0 = arith.constant 0 : i32
    %c0_i32_1 = arith.constant 0 : i32
    return %c0_i32, %c0_i32_0 : i32, i32
  }
  func.func @transform_5(%arg0: i32, %arg1: i32) -> (i32, i32) {
    %c0_i32 = arith.constant 0 : i32
    %c0_i32_0 = arith.constant 0 : i32
    return %arg0, %c0_i32 : i32, i32
  }
}

</mosaic_0001>

<llo_original>
// kernel: mlp_forward.1
$region0: #{mlp_forward.1}
  #allocation0 [shape = 'u32[]', space=smem, size = 0x4, offset = 0x4, fixed_abs, tag = 'smem constant byte address 0x4 - core index']
  #allocation1 [shape = 'u32[144,128]{1,0:T(1,128)}', space=vmem, size = 0x12000, scoped, tag = 'internal scratch']
  #allocation2 [shape = 'f32[8,128]{1,0:T(8,128)}', space=vmem, size = 0x1000, scoped, tag = 'scratch operand']
  %s0 = inlined_call_operand.vmem [shape: f32[8,32], index: 0, kind: input, shape index: {}]
  %s1 = inlined_call_operand.vmem [shape: f32[32,128], index: 1, kind: input, shape index: {}]
  %s2 = inlined_call_operand.vmem [shape: f32[1,128], index: 2, kind: input, shape index: {}]
  %s3 = inlined_call_operand.vmem [shape: f32[128,128], index: 3, kind: input, shape index: {}]
  %s4 = inlined_call_operand.vmem [shape: f32[1,128], index: 4, kind: input, shape index: {}]
  %s5 = inlined_call_operand.hbm [shape: f32[8,128], index: 5, kind: output, shape index: {}]
  %s6 = sld [smem:[#allocation0]]
  $region38: #{mlp_forward.1} parent=0
    _
  %s8 = ssub.s32 1, %s6
  %s9 = scalar_select 0, %s8, %s6
  $region1: #{mlp_forward.1} parent=0
    #allocation3 [shape = 'u8[4096]{0}', space=vmem, size = 0x1000, scoped, tag = 'output window, operand 0, single buffered']
    #allocation4 [shape = 's32[1]{0}', space=sflag, size = 0x4, scoped, tag = 'scoped memory for mlp_forward.1']
    %10 = vsyncpa [#allocation4], 0
    // Predicated region
    $region2: #{mlp_forward.1} parent=1 // pred_check
      _
    $region3: #{mlp_forward.1} parent=1 // pred_check_branch
      %12 = sbr.rel (0) target = $region5
    $region4: #{mlp_forward.1} parent=1 // pred_region
      _
    $region5: #{mlp_forward.1} parent=1 // pred_fallthru
      _
    // Predicated region
    $region6: #{mlp_forward.1} parent=1 // pred_check
      _
    $region7: #{mlp_forward.1} parent=1 // pred_check_branch
      %14 = sbr.rel (0) target = $region9
    $region8: #{mlp_forward.1} parent=1 // pred_region
      _
    $region9: #{mlp_forward.1} parent=1 // pred_fallthru
      _
    // Predicated region
    $region10: #{mlp_forward.1} parent=1 // pred_check
      _
    $region11: #{mlp_forward.1} parent=1 // pred_check_branch
      %16 = sbr.rel (0) target = $region13
    $region12: #{mlp_forward.1} parent=1 // pred_region
      _
    $region13: #{mlp_forward.1} parent=1 // pred_fallthru
      _
    // Predicated region
    $region14: #{mlp_forward.1} parent=1 // pred_check
      _
    $region15: #{mlp_forward.1} parent=1 // pred_check_branch
      %18 = sbr.rel (0) target = $region17
    $region16: #{mlp_forward.1} parent=1 // pred_region
      _
    $region17: #{mlp_forward.1} parent=1 // pred_fallthru
      _
    // Predicated region
    $region18: #{mlp_forward.1} parent=1 // pred_check
      _
    $region19: #{mlp_forward.1} parent=1 // pred_check_branch
      %20 = sbr.rel (0) target = $region21
    $region20: #{mlp_forward.1} parent=1 // pred_region
      _
    $region21: #{mlp_forward.1} parent=1 // pred_fallthru
      _
    %p21 = scmp.eq.s32.totalorder 0, 0
    // Predicated region
    $region22: #{mlp_forward.1} parent=1 // pred_check
      %p22 = pneg %p21
    $region23: #{mlp_forward.1} parent=1 // pred_check_branch
      %24 = sbr.rel (%p22) target = $region25
    $region24: #{mlp_forward.1} parent=1 // pred_region
      %25 = vst [vmem:[#allocation2] sm:$0xff] 0.0
    $region25: #{mlp_forward.1} parent=1 // pred_fallthru
      _
    %v26 = vld [vmem:[%s0] sm:$0xff]
    %v27 = vld [vmem:[%s1] sm:$0xff]
    %v28 = vld [vmem:[%s1 + $0x8] sm:$0xff]
    %v29 = vld [vmem:[%s1 + $0x10] sm:$0xff]
    %v30 = vld [vmem:[%s1 + $0x18] sm:$0xff]
    %v31 = vld [vmem:[%s2] sm:$0x1]
    %v33 = vlaneseq
    %v34 = vshrl.u32 %v33, 7
    %v35 = vsub.s32 0, %v34
    %v36 = vrot.slane %v31, %v35
    %vm38 = vcmask 261120
    %v40 = vsel %vm38, %v26, 0
    %42 = vmatprep.subr.mxu0 0.0
    %43 = vmatpush1.msra.mxu0 %v27
    %44 = vmatprep.subr.mxu0 0.0
    %45 = vmatpush1.msra.mxu0 %v28
    %46 = vmatprep.subr.mxu0 0.0
    %47 = vmatpush1.msra.mxu0 %v29
    %48 = vmatprep.subr.mxu0 0.0
    %49 = vmatpush1.msra.mxu0 %v30
    %50 = vmatprep.subr.mxu0 0.0
    %51 = vmatpush1.msra.mxu0 0.0
    %52 = vmatprep.subr.mxu0 0.0
    %53 = vmatpush1.msra.mxu0 0.0
    %54 = vmatprep.subr.mxu0 0.0
    %55 = vmatpush1.msra.mxu0 0.0
    %56 = vmatprep.subr.mxu0 0.0
    %57 = vmatpush1.msra.mxu0 0.0
    %58 = vmatprep.subr.mxu0 0.0
    %59 = vmatpush1.msra.mxu0 0.0
    %60 = vmatprep.subr.mxu0 0.0
    %61 = vmatpush1.msra.mxu0 0.0
    %62 = vmatprep.subr.mxu0 0.0
    %63 = vmatpush1.msra.mxu0 0.0
    %64 = vmatprep.subr.mxu0 0.0
    %65 = vmatpush1.msra.mxu0 0.0
    %66 = vmatprep.subr.mxu0 0.0
    %67 = vmatpush1.msra.mxu0 0.0
    %68 = vmatprep.subr.mxu0 0.0
    %69 = vmatpush1.msra.mxu0 0.0
    %70 = vmatprep.subr.mxu0 0.0
    %71 = vmatpush1.msra.mxu0 0.0
    %72 = vmatprep.subr.mxu0 0.0
    %73 = vmatpush1.msra.mxu0 0.0
    %74 = vmatprep.subr.mxu0 0.0
    %75 = vmatpush1.msra.mxu0 0.0
    %76 = vmatprep.subr.mxu0 0.0
    %77 = vmatpush1.msra.mxu0 0.0
    %78 = vmatprep.subr.mxu0 0.0
    %79 = vmatpush1.msra.mxu0 0.0
    %80 = vmatprep.subr.mxu0 0.0
    %81 = vmatpush1.msra.mxu0 0.0
    %82 = vmatprep.subr.mxu0 0.0
    %83 = vmatpush1.msra.mxu0 0.0
    %84 = vmatprep.subr.mxu0 0.0
    %85 = vmatpush1.msra.mxu0 0.0
    %86 = vmatprep.subr.mxu0 0.0
    %87 = vmatpush1.msra.mxu0 0.0
    %88 = vmatprep.subr.mxu0 0.0
    %89 = vmatpush1.msra.mxu0 0.0
    %90 = vmatprep.subr.mxu0 0.0
    %91 = vmatpush1.msra.mxu0 0.0
    %92 = vmatprep.subr.mxu0 0.0
    %93 = vmatpush1.msra.mxu0 0.0
    %94 = vmatprep.subr.mxu0 0.0
    %95 = vmatpush1.msra.mxu0 0.0
    %96 = vmatprep.subr.mxu0 0.0
    %97 = vmatpush1.msra.mxu0 0.0
    %98 = vmatprep.subr.mxu0 0.0
    %99 = vmatpush1.msra.mxu0 0.0
    %100 = vmatprep.subr.mxu0 0.0
    %101 = vmatpush1.msra.mxu0 0.0
    %102 = vmatprep.subr.mxu0 0.0
    %103 = vmatpush1.msra.mxu0 0.0
    %104 = vmatprep.subr.mxu0 0.0
    %105 = vmatpush1.msra.mxu0 0.0
    %106 = vmatprep.mubr.f32.mxu0 0.0
    %107 = vmatmul.mubr.f32.gmra.mrb[0].mxu0 %v40
    %v108 = vpop.f32.mrb[0].mxu0
    %v109 = vadd.f32 %v36, %v108
    %v110 = vpop.f32.mrb[0].mxu0
    %111 = vdwg.mxu0
    %v112 = vmax.f32 %v109, 0.0
    %v113 = vld [vmem:[#allocation2] sm:$0xff]
    %v114 = vld [vmem:[%s3] sm:$0xff]
    %v115 = vld [vmem:[%s3 + $0x8] sm:$0xff]
    %v116 = vld [vmem:[%s3 + $0x10] sm:$0xff]
    %v117 = vld [vmem:[%s3 + $0x18] sm:$0xff]
    %v118 = vld [vmem:[%s3 + $0x20] sm:$0xff]
    %v119 = vld [vmem:[%s3 + $0x28] sm:$0xff]
    %v120 = vld [vmem:[%s3 + $0x30] sm:$0xff]
    %v121 = vld [vmem:[%s3 + $0x38] sm:$0xff]
    %v122 = vld [vmem:[%s3 + $0x40] sm:$0xff]
    %v123 = vld [vmem:[%s3 + $0x48] sm:$0xff]
    %v124 = vld [vmem:[%s3 + $0x50] sm:$0xff]
    %v125 = vld [vmem:[%s3 + $0x58] sm:$0xff]
    %v126 = vld [vmem:[%s3 + $0x60] sm:$0xff]
    %v127 = vld [vmem:[%s3 + $0x68] sm:$0xff]
    %v128 = vld [vmem:[%s3 + $0x70] sm:$0xff]
    %v129 = vld [vmem:[%s3 + $0x78] sm:$0xff]
    %130 = vmatprep.subr.mxu0 0.0
    %131 = vmatpush1.msra.mxu0 %v114
    %132 = vmatprep.subr.mxu0 0.0
    %133 = vmatpush1.msra.mxu0 %v115
    %134 = vmatprep.subr.mxu0 0.0
    %135 = vmatpush1.msra.mxu0 %v116
    %136 = vmatprep.subr.mxu0 0.0
    %137 = vmatpush1.msra.mxu0 %v117
    %138 = vmatprep.subr.mxu0 0.0
    %139 = vmatpush1.msra.mxu0 %v118
    %140 = vmatprep.subr.mxu0 0.0
    %141 = vmatpush1.msra.mxu0 %v119
    %142 = vmatprep.subr.mxu0 0.0
    %143 = vmatpush1.msra.mxu0 %v120
    %144 = vmatprep.subr.mxu0 0.0
    %145 = vmatpush1.msra.mxu0 %v121
    %146 = vmatprep.subr.mxu0 0.0
    %147 = vmatpush1.msra.mxu0 %v122
    %148 = vmatprep.subr.mxu0 0.0
    %149 = vmatpush1.msra.mxu0 %v123
    %150 = vmatprep.subr.mxu0 0.0
    %151 = vmatpush1.msra.mxu0 %v124
    %152 = vmatprep.subr.mxu0 0.0
    %153 = vmatpush1.msra.mxu0 %v125
    %154 = vmatprep.subr.mxu0 0.0
    %155 = vmatpush1.msra.mxu0 %v126
    %156 = vmatprep.subr.mxu0 0.0
    %157 = vmatpush1.msra.mxu0 %v127
    %158 = vmatprep.subr.mxu0 0.0
    %159 = vmatpush1.msra.mxu0 %v128
    %160 = vmatprep.subr.mxu0 0.0
    %161 = vmatpush1.msra.mxu0 %v129
    %162 = vmatprep.subr.mxu0 0.0
    %163 = vmatpush1.msra.mxu0 0.0
    %164 = vmatprep.subr.mxu0 0.0
    %165 = vmatpush1.msra.mxu0 0.0
    %166 = vmatprep.subr.mxu0 0.0
    %167 = vmatpush1.msra.mxu0 0.0
    %168 = vmatprep.subr.mxu0 0.0
    %169 = vmatpush1.msra.mxu0 0.0
    %170 = vmatprep.subr.mxu0 0.0
    %171 = vmatpush1.msra.mxu0 0.0
    %172 = vmatprep.subr.mxu0 0.0
    %173 = vmatpush1.msra.mxu0 0.0
    %174 = vmatprep.subr.mxu0 0.0
    %175 = vmatpush1.msra.mxu0 0.0
    %176 = vmatprep.subr.mxu0 0.0
    %177 = vmatpush1.msra.mxu0 0.0
    %178 = vmatprep.subr.mxu0 0.0
    %179 = vmatpush1.msra.mxu0 0.0
    %180 = vmatprep.subr.mxu0 0.0
    %181 = vmatpush1.msra.mxu0 0.0
    %182 = vmatprep.subr.mxu0 0.0
    %183 = vmatpush1.msra.mxu0 0.0
    %184 = vmatprep.subr.mxu0 0.0
    %185 = vmatpush1.msra.mxu0 0.0
    %186 = vmatprep.subr.mxu0 0.0
    %187 = vmatpush1.msra.mxu0 0.0
    %188 = vmatprep.subr.mxu0 0.0
    %189 = vmatpush1.msra.mxu0 0.0
    %190 = vmatprep.subr.mxu0 0.0
    %191 = vmatpush1.msra.mxu0 0.0
    %192 = vmatprep.subr.mxu0 0.0
    %193 = vmatpush1.msra.mxu0 0.0
    %194 = vmatprep.mubr.f32.mxu0 0.0
    %195 = vmatmul.mubr.f32.gmra.mrb[0].mxu0 %v112
    %v196 = vpop.f32.mrb[0].mxu0
    %v197 = vadd.f32 0.0, %v196
    %v198 = vpop.f32.mrb[0].mxu0
    %199 = vdwg.mxu0
    %v200 = vadd.f32 %v113, %v197
    %201 = vst [vmem:[#allocation2] sm:$0xff] %v200
    // Predicated region
    $region26: #{mlp_forward.1} parent=1 // pred_check
      %p202 = pneg %p21
    $region27: #{mlp_forward.1} parent=1 // pred_check_branch
      %204 = sbr.rel (%p202) target = $region29
    $region28: #{mlp_forward.1} parent=1 // pred_region
      %v205 = vld [vmem:[#allocation2] sm:$0xff]
      %v206 = vld [vmem:[%s4] sm:$0x1]
      %v208 = vlaneseq
      %v209 = vshrl.u32 %v208, 7
      %v210 = vsub.s32 0, %v209
      %v211 = vrot.slane %v206, %v210
      %v213 = vadd.f32 %v205, %v211
      %214 = vst [vmem:[#allocation3] sm:$0xff] %v213
    $region29: #{mlp_forward.1} parent=1 // pred_fallthru
      _
    // Predicated region
    $region30: #{mlp_forward.1} parent=1 // pred_check
      _
    $region31: #{mlp_forward.1} parent=1 // pred_check_branch
      %216 = sbr.rel (0) target = $region33
    $region32: #{mlp_forward.1} parent=1 // pred_region
      %s218 = ssub.s32 128, 128
      %219 = vsyncadd [#allocation4], %s218
      %s221 = sshll.u32 [#allocation3], 4
      %s222 = int_to_ptr.vmem [resolvable:$true] %s221
      %224 = dma.vmem_to_hbm [thread:$0]  %s222, 128, %s5, [#allocation4]
    $region33: #{mlp_forward.1} parent=1 // pred_fallthru
      _
    // Predicated region
    $region34: #{mlp_forward.1} parent=1 // pred_check
      _
    $region35: #{mlp_forward.1} parent=1 // pred_check_branch
      %226 = sbr.rel (0) target = $region37
    $region36: #{mlp_forward.1} parent=1 // pred_region
      %227 = dma.done [#allocation4], 128
    $region37: #{mlp_forward.1} parent=1 // pred_fallthru
      _
    %228 = vsyncpa [#allocation4], 1

</llo_original>
